<compile_context>
chip_gen: v7x
topology: tpu7x:2x2x1
jax: 0.10.0
libtpu: 0.0.40
codegen_flags: <defaults>
</compile_context>

<pallas_src>
import numpy as np
import jax
import jax.numpy as jnp
from jax import lax
from jax.experimental import pallas as pl
from jax.experimental.pallas import tpu as pltpu

# ---------------- model hyper-params (consistent with the module) -----------
INPUT_LENGTH = 32   # input_length
HIDDEN_SIZE = 4     # hidden_size
K = 4               # number of mixture components
N = 8               # batch size
PAD = 128           # lane-padded width for every activation / weight output
FANIN_PAD = 32      # max fan-in across all 9 layers (sublane dim of wpack)
NUM_LAYERS = 9      # 3 encoder + 3 decoder + 3 GMM linears

# Architecture derived from AEModel.__init__ with (input_length=32, hidden=4):
#   encoder: Linear(32,16) Tanh Linear(16,8) Tanh Linear(8,4)
#   decoder: Linear(4,8)  Tanh Linear(8,16) Tanh Linear(16,32)
# GMM (DAGMMModel.resolve_params):
#   Linear(6,10) Tanh Linear(10,20) Tanh Dropout(0.5) Linear(20,4) Softmax(dim=1)
ENC_DIMS = [32, 16, 8, 4]
DEC_DIMS = [4, 8, 16, 32]
GMM_DIMS = [HIDDEN_SIZE + 2, 10, 20, K]

COSIM_EPS = 1e-8   # nn.CosineSimilarity default eps
NEG_BIG = -1e30    # softmax mask value for padded lanes


def dagmm_kernel(x_ref, w_ref, b_ref, out_ref):
    """x_ref  : (N, INPUT_LENGTH) f32   -- natural (un-padded) input
       w_ref  : (9, FANIN_PAD, PAD) f32 -- layer i weight ([in, out]), zero-padded
       b_ref  : (9, PAD) f32            -- layer i bias, zero-padded
       out_ref: (3, N, PAD) f32         -- [0]=x_prime, [1]=z_r, [2]=gamma
    """
    x = x_ref[...]                       # (N, 32)
    n = x.shape[0]

    def linear(h, i):
        # h: (N, FANIN_PAD). Padded rows/cols of w and padded lanes of b are
        # exactly zero, so padded output lanes stay exactly 0.
        return jnp.dot(h, w_ref[i], preferred_element_type=jnp.float32) + b_ref[i]

    def linear_w(h_wide, i):
        # Slice the (N, PAD) activation down to the 32 fan-in lanes (lanes
        # >= fan_in are exact zeros) before feeding the MXU.
        return linear(h_wide[:, :FANIN_PAD], i)

    # ---------------- encoder: Linear-Tanh-Linear-Tanh-Linear ---------------
    h = jnp.tanh(linear(x, 0))           # x already has the 32-lane fan-in width
    h = jnp.tanh(linear_w(h, 1))
    code = linear_w(h, 2)                # valid cols [0, HIDDEN_SIZE)

    # ---------------- decoder: Linear-Tanh-Linear-Tanh-Linear ---------------
    d = jnp.tanh(linear_w(code, 3))
    d = jnp.tanh(linear_w(d, 4))
    x_prime = linear_w(d, 5)             # valid cols [0, INPUT_LENGTH)

    # ---------------- reconstruction statistics (dim=1) ---------------------
    xp = x_prime[:, :INPUT_LENGTH]       # lanes >= 32 of x_prime are exact zeros
    diff = x - xp
    x_sq = jnp.sum(x * x, axis=1, keepdims=True)
    d_sq = jnp.sum(diff * diff, axis=1, keepdims=True)
    xp_sq = jnp.sum(xp * xp, axis=1, keepdims=True)
    x_dot_xp = jnp.sum(x * xp, axis=1, keepdims=True)

    # relative_euclidean_dist = ||x - x'|| / ||x||
    # TODO(synk): no eps guard here, matching the reference (all-zero row -> nan).
    rel = jnp.sqrt(d_sq) * lax.rsqrt(x_sq)
    # nn.CosineSimilarity(dim=1): dot / max(||x||*||x'||, eps)
    cos = x_dot_xp * lax.rsqrt(jnp.maximum(x_sq * xp_sq, COSIM_EPS * COSIM_EPS))

    # z_r = [code | rel | cos] built with lane selects (no cross-lane concat);
    # code already has exact zeros at lanes >= HIDDEN_SIZE.
    lane = lax.broadcasted_iota(jnp.int32, (n, PAD), 1)
    z_r = (code
           + jnp.where(lane == HIDDEN_SIZE, rel, 0.0)
           + jnp.where(lane == HIDDEN_SIZE + 1, cos, 0.0))

    # ---------------- GMM estimation net ------------------------------------
    # TODO(synk): Dropout(0.5) is identity here (inference semantics).
    g = jnp.tanh(linear_w(z_r, 6))
    g = jnp.tanh(linear_w(g, 7))
    logits = linear_w(g, 8)
    logits = jnp.where(lane < K, logits, NEG_BIG)        # mask padded lanes
    m = jnp.max(logits, axis=1, keepdims=True)
    e = jnp.exp(logits - m)
    # exact reciprocal: gamma rows must sum to 1 to float precision
    gamma = e * pl.reciprocal(jnp.sum(e, axis=1, keepdims=True), approx=False)

    # ---------------- single packed, lane-dense output slab ------------------
    out_ref[0] = x_prime
    out_ref[1] = z_r
    out_ref[2] = gamma


# ---------------- parameter construction / packing --------------------------
def init_linear(key, fan_in, fan_out):
    """PyTorch-like init: U(-1/sqrt(fan_in), 1/sqrt(fan_in)).
    Weight is [in, out] (already transposed for x @ W)."""
    kw, kb = jax.random.split(key)
    bound = 1.0 / np.sqrt(float(fan_in))
    w = jax.random.uniform(kw, (fan_in, fan_out), jnp.float32, -bound, bound)
    b = jax.random.uniform(kb, (fan_out,), jnp.float32, -bound, bound)
    return w, b


def make_params(seed=0):
    key = jax.random.PRNGKey(seed)
    keys = jax.random.split(key, NUM_LAYERS)
    dims_all = (list(zip(ENC_DIMS[:-1], ENC_DIMS[1:]))
                + list(zip(DEC_DIMS[:-1], DEC_DIMS[1:]))
                + list(zip(GMM_DIMS[:-1], GMM_DIMS[1:])))
    return [init_linear(k, fi, fo) for k, (fi, fo) in zip(keys, dims_all)]


def pack_params(params):
    """Collapse the 9 (w, b) pairs into two padded buffers (done once, host-side).
    wpack sublane dim = 32 (max fan-in) -> 144 KB instead of 576 KB."""
    wpack = np.zeros((NUM_LAYERS, FANIN_PAD, PAD), np.float32)
    bpack = np.zeros((NUM_LAYERS, PAD), np.float32)
    for i, (w, b) in enumerate(params):
        fi, fo = w.shape
        wpack[i, :fi, :fo] = np.asarray(w)
        bpack[i, :fo] = np.asarray(b)
    return jnp.asarray(wpack), jnp.asarray(bpack)


# ---------------- JAX wrapper ------------------------------------------------
@jax.jit
def dagmm_forward(x, wpack, bpack):
    n = x.shape[0]
    x = x.astype(jnp.float32)
    vmem = pl.BlockSpec(memory_space=pltpu.MemorySpace.VMEM)
    # TODO(synk): for production batch sizes, add a ("parallel",) grid over the
    # batch dim (BlockSpec((TILE_N, PAD), lambda i: (i, 0)); TILE_N = 256 on
    # v6e/v7x, 128 on v5e) with constant index_maps for wpack/bpack so weights
    # stay VMEM-resident; at N=8 one call is optimal.
    out = pl.pallas_call(
        dagmm_kernel,
        out_shape=jax.ShapeDtypeStruct((3, n, PAD), jnp.float32),
        in_specs=[vmem, vmem, vmem],
        out_specs=vmem,
    )(x, wpack, bpack)
    x_prime = out[0, :, :INPUT_LENGTH]
    z_r = out[1, :, :HIDDEN_SIZE + 2]
    code = z_r[:, :HIDDEN_SIZE]
    cosim = z_r[:, HIDDEN_SIZE + 1]
    gamma = out[2, :, :K]
    return code, x_prime, cosim, z_r, gamma


# ---------------- pure-JAX reference (for correctness check) -----------------
def dagmm_reference(x, params):
    x = x.astype(jnp.float32)
    (w0, b0), (w1, b1), (w2, b2), (w3, b3), (w4, b4), (w5, b5), \
        (w6, b6), (w7, b7), (w8, b8) = params
    h = jnp.tanh(x @ w0 + b0)
    h = jnp.tanh(h @ w1 + b1)
    code = h @ w2 + b2
    d = jnp.tanh(code @ w3 + b3)
    d = jnp.tanh(d @ w4 + b4)
    x_prime = d @ w5 + b5
    xn = jnp.linalg.norm(x, axis=1)
    xpn = jnp.linalg.norm(x_prime, axis=1)
    rel = jnp.linalg.norm(x - x_prime, axis=1) / xn
    cos = jnp.sum(x * x_prime, axis=1) / jnp.maximum(xn * xpn, COSIM_EPS)
    z_r = jnp.concatenate([code, rel[:, None], cos[:, None]], axis=1)
    g = jnp.tanh(z_r @ w6 + b6)
    g = jnp.tanh(g @ w7 + b7)
    gamma = jax.nn.softmax(g @ w8 + b8, axis=1)
    return code, x_prime, cos, z_r, gamma


if __name__ == "__main__":
    key = jax.random.PRNGKey(0)
    x = jax.random.normal(key, (N, INPUT_LENGTH), jnp.float32)
    params = make_params(seed=0)
    wpack, bpack = pack_params(params)

    outs = dagmm_forward(x, wpack, bpack)
    jax.block_until_ready(outs)
    code, x_prime, cosim, z_r, gamma = outs

    assert code.shape == (N, HIDDEN_SIZE)
    assert x_prime.shape == (N, INPUT_LENGTH)
    assert cosim.shape == (N,)
    assert z_r.shape == (N, HIDDEN_SIZE + 2)
    assert gamma.shape == (N, K)
    # exact reciprocal -> softmax rows sum to 1 to float precision
    assert bool(jnp.allclose(jnp.sum(gamma, axis=1), 1.0, atol=1e-5))

    ref = dagmm_reference(x, params)
    for got, want in zip(outs, ref):
        assert bool(jnp.allclose(got, want, atol=1e-3, rtol=1e-3))

    print("KERNEL_OK")
</pallas_src>

<mosaic_0001>
module attributes {stable_mosaic.version = 11 : i64} {
  func.func @dagmm_kernel(%arg0: memref<8x32xf32, #tpu.memory_space<vmem>>, %arg1: memref<9x32x128xf32, #tpu.memory_space<vmem>>, %arg2: memref<9x128xf32, #tpu.memory_space<vmem>>, %arg3: memref<3x8x128xf32, #tpu.memory_space<vmem>>) attributes {dimension_semantics = [], scalar_prefetch = 0 : i64, scratch_operands = 0 : i64, tpu.core_type = #tpu.core_type<tc>} {
    %c0 = arith.constant 0 : index
    %c0_0 = arith.constant 0 : index
    %0 = vector.load %arg0[%c0, %c0_0] : memref<8x32xf32, #tpu.memory_space<vmem>>, vector<8x32xf32>
    %c0_1 = arith.constant 0 : index
    %c0_2 = arith.constant 0 : index
    %c0_3 = arith.constant 0 : index
    %1 = vector.load %arg1[%c0_1, %c0_2, %c0_3] : memref<9x32x128xf32, #tpu.memory_space<vmem>>, vector<1x32x128xf32>
    %2 = vector.shape_cast %1 : vector<1x32x128xf32> to vector<32x128xf32>
    %cst = arith.constant dense<0.000000e+00> : vector<8x128xf32>
    %3 = tpu.matmul %0, %2, %cst {dimension_numbers = #tpu.dot_dimension_numbers<[1], [0], [0], [1], [0, 0, 1, 1], [], []>} : vector<8x32xf32>, vector<32x128xf32>, vector<8x128xf32> -> vector<8x128xf32>
    %c0_4 = arith.constant 0 : index
    %c0_5 = arith.constant 0 : index
    %4 = vector.load %arg2[%c0_4, %c0_5] : memref<9x128xf32, #tpu.memory_space<vmem>>, vector<1x128xf32>
    %5 = vector.shape_cast %4 : vector<1x128xf32> to vector<128xf32>
    %6 = vector.shape_cast %5 : vector<128xf32> to vector<1x128xf32>
    %7 = vector.broadcast %6 : vector<1x128xf32> to vector<8x128xf32>
    %8 = arith.addf %3, %7 : vector<8x128xf32>
    %9 = math.tanh %8 : vector<8x128xf32>
    %10 = vector.extract_strided_slice %9 {offsets = [0, 0], sizes = [8, 32], strides = [1, 1]} : vector<8x128xf32> to vector<8x32xf32>
    %c1 = arith.constant 1 : index
    %c0_6 = arith.constant 0 : index
    %c0_7 = arith.constant 0 : index
    %11 = vector.load %arg1[%c1, %c0_6, %c0_7] : memref<9x32x128xf32, #tpu.memory_space<vmem>>, vector<1x32x128xf32>
    %12 = vector.shape_cast %11 : vector<1x32x128xf32> to vector<32x128xf32>
    %cst_8 = arith.constant dense<0.000000e+00> : vector<8x128xf32>
    %13 = tpu.matmul %10, %12, %cst_8 {dimension_numbers = #tpu.dot_dimension_numbers<[1], [0], [0], [1], [0, 0, 1, 1], [], []>} : vector<8x32xf32>, vector<32x128xf32>, vector<8x128xf32> -> vector<8x128xf32>
    %c1_9 = arith.constant 1 : index
    %c0_10 = arith.constant 0 : index
    %14 = vector.load %arg2[%c1_9, %c0_10] : memref<9x128xf32, #tpu.memory_space<vmem>>, vector<1x128xf32>
    %15 = vector.shape_cast %14 : vector<1x128xf32> to vector<128xf32>
    %16 = vector.shape_cast %15 : vector<128xf32> to vector<1x128xf32>
    %17 = vector.broadcast %16 : vector<1x128xf32> to vector<8x128xf32>
    %18 = arith.addf %13, %17 : vector<8x128xf32>
    %19 = math.tanh %18 : vector<8x128xf32>
    %20 = vector.extract_strided_slice %19 {offsets = [0, 0], sizes = [8, 32], strides = [1, 1]} : vector<8x128xf32> to vector<8x32xf32>
    %c2 = arith.constant 2 : index
    %c0_11 = arith.constant 0 : index
    %c0_12 = arith.constant 0 : index
    %21 = vector.load %arg1[%c2, %c0_11, %c0_12] : memref<9x32x128xf32, #tpu.memory_space<vmem>>, vector<1x32x128xf32>
    %22 = vector.shape_cast %21 : vector<1x32x128xf32> to vector<32x128xf32>
    %cst_13 = arith.constant dense<0.000000e+00> : vector<8x128xf32>
    %23 = tpu.matmul %20, %22, %cst_13 {dimension_numbers = #tpu.dot_dimension_numbers<[1], [0], [0], [1], [0, 0, 1, 1], [], []>} : vector<8x32xf32>, vector<32x128xf32>, vector<8x128xf32> -> vector<8x128xf32>
    %c2_14 = arith.constant 2 : index
    %c0_15 = arith.constant 0 : index
    %24 = vector.load %arg2[%c2_14, %c0_15] : memref<9x128xf32, #tpu.memory_space<vmem>>, vector<1x128xf32>
    %25 = vector.shape_cast %24 : vector<1x128xf32> to vector<128xf32>
    %26 = vector.shape_cast %25 : vector<128xf32> to vector<1x128xf32>
    %27 = vector.broadcast %26 : vector<1x128xf32> to vector<8x128xf32>
    %28 = arith.addf %23, %27 : vector<8x128xf32>
    %29 = vector.extract_strided_slice %28 {offsets = [0, 0], sizes = [8, 32], strides = [1, 1]} : vector<8x128xf32> to vector<8x32xf32>
    %c3 = arith.constant 3 : index
    %c0_16 = arith.constant 0 : index
    %c0_17 = arith.constant 0 : index
    %30 = vector.load %arg1[%c3, %c0_16, %c0_17] : memref<9x32x128xf32, #tpu.memory_space<vmem>>, vector<1x32x128xf32>
    %31 = vector.shape_cast %30 : vector<1x32x128xf32> to vector<32x128xf32>
    %cst_18 = arith.constant dense<0.000000e+00> : vector<8x128xf32>
    %32 = tpu.matmul %29, %31, %cst_18 {dimension_numbers = #tpu.dot_dimension_numbers<[1], [0], [0], [1], [0, 0, 1, 1], [], []>} : vector<8x32xf32>, vector<32x128xf32>, vector<8x128xf32> -> vector<8x128xf32>
    %c3_19 = arith.constant 3 : index
    %c0_20 = arith.constant 0 : index
    %33 = vector.load %arg2[%c3_19, %c0_20] : memref<9x128xf32, #tpu.memory_space<vmem>>, vector<1x128xf32>
    %34 = vector.shape_cast %33 : vector<1x128xf32> to vector<128xf32>
    %35 = vector.shape_cast %34 : vector<128xf32> to vector<1x128xf32>
    %36 = vector.broadcast %35 : vector<1x128xf32> to vector<8x128xf32>
    %37 = arith.addf %32, %36 : vector<8x128xf32>
    %38 = math.tanh %37 : vector<8x128xf32>
    %39 = vector.extract_strided_slice %38 {offsets = [0, 0], sizes = [8, 32], strides = [1, 1]} : vector<8x128xf32> to vector<8x32xf32>
    %c4 = arith.constant 4 : index
    %c0_21 = arith.constant 0 : index
    %c0_22 = arith.constant 0 : index
    %40 = vector.load %arg1[%c4, %c0_21, %c0_22] : memref<9x32x128xf32, #tpu.memory_space<vmem>>, vector<1x32x128xf32>
    %41 = vector.shape_cast %40 : vector<1x32x128xf32> to vector<32x128xf32>
    %cst_23 = arith.constant dense<0.000000e+00> : vector<8x128xf32>
    %42 = tpu.matmul %39, %41, %cst_23 {dimension_numbers = #tpu.dot_dimension_numbers<[1], [0], [0], [1], [0, 0, 1, 1], [], []>} : vector<8x32xf32>, vector<32x128xf32>, vector<8x128xf32> -> vector<8x128xf32>
    %c4_24 = arith.constant 4 : index
    %c0_25 = arith.constant 0 : index
    %43 = vector.load %arg2[%c4_24, %c0_25] : memref<9x128xf32, #tpu.memory_space<vmem>>, vector<1x128xf32>
    %44 = vector.shape_cast %43 : vector<1x128xf32> to vector<128xf32>
    %45 = vector.shape_cast %44 : vector<128xf32> to vector<1x128xf32>
    %46 = vector.broadcast %45 : vector<1x128xf32> to vector<8x128xf32>
    %47 = arith.addf %42, %46 : vector<8x128xf32>
    %48 = math.tanh %47 : vector<8x128xf32>
    %49 = vector.extract_strided_slice %48 {offsets = [0, 0], sizes = [8, 32], strides = [1, 1]} : vector<8x128xf32> to vector<8x32xf32>
    %c5 = arith.constant 5 : index
    %c0_26 = arith.constant 0 : index
    %c0_27 = arith.constant 0 : index
    %50 = vector.load %arg1[%c5, %c0_26, %c0_27] : memref<9x32x128xf32, #tpu.memory_space<vmem>>, vector<1x32x128xf32>
    %51 = vector.shape_cast %50 : vector<1x32x128xf32> to vector<32x128xf32>
    %cst_28 = arith.constant dense<0.000000e+00> : vector<8x128xf32>
    %52 = tpu.matmul %49, %51, %cst_28 {dimension_numbers = #tpu.dot_dimension_numbers<[1], [0], [0], [1], [0, 0, 1, 1], [], []>} : vector<8x32xf32>, vector<32x128xf32>, vector<8x128xf32> -> vector<8x128xf32>
    %c5_29 = arith.constant 5 : index
    %c0_30 = arith.constant 0 : index
    %53 = vector.load %arg2[%c5_29, %c0_30] : memref<9x128xf32, #tpu.memory_space<vmem>>, vector<1x128xf32>
    %54 = vector.shape_cast %53 : vector<1x128xf32> to vector<128xf32>
    %55 = vector.shape_cast %54 : vector<128xf32> to vector<1x128xf32>
    %56 = vector.broadcast %55 : vector<1x128xf32> to vector<8x128xf32>
    %57 = arith.addf %52, %56 : vector<8x128xf32>
    %58 = vector.extract_strided_slice %57 {offsets = [0, 0], sizes = [8, 32], strides = [1, 1]} : vector<8x128xf32> to vector<8x32xf32>
    %59 = arith.subf %0, %58 : vector<8x32xf32>
    %60 = arith.mulf %0, %0 : vector<8x32xf32>
    %cst_31 = arith.constant dense<0.000000e+00> : vector<8xf32>
    %61 = vector.multi_reduction <add>, %60, %cst_31 [1] : vector<8x32xf32> to vector<8xf32>
    %62 = vector.shape_cast %61 : vector<8xf32> to vector<8x1xf32>
    %63 = arith.mulf %59, %59 : vector<8x32xf32>
    %cst_32 = arith.constant dense<0.000000e+00> : vector<8xf32>
    %64 = vector.multi_reduction <add>, %63, %cst_32 [1] : vector<8x32xf32> to vector<8xf32>
    %65 = vector.shape_cast %64 : vector<8xf32> to vector<8x1xf32>
    %66 = arith.mulf %58, %58 : vector<8x32xf32>
    %cst_33 = arith.constant dense<0.000000e+00> : vector<8xf32>
    %67 = vector.multi_reduction <add>, %66, %cst_33 [1] : vector<8x32xf32> to vector<8xf32>
    %68 = vector.shape_cast %67 : vector<8xf32> to vector<8x1xf32>
    %69 = arith.mulf %0, %58 : vector<8x32xf32>
    %cst_34 = arith.constant dense<0.000000e+00> : vector<8xf32>
    %70 = vector.multi_reduction <add>, %69, %cst_34 [1] : vector<8x32xf32> to vector<8xf32>
    %71 = vector.shape_cast %70 : vector<8xf32> to vector<8x1xf32>
    %72 = math.sqrt %65 : vector<8x1xf32>
    %73 = math.rsqrt %62 : vector<8x1xf32>
    %74 = arith.mulf %72, %73 : vector<8x1xf32>
    %75 = arith.mulf %62, %68 : vector<8x1xf32>
    %cst_35 = arith.constant 1.000000e-16 : f32
    %76 = vector.broadcast %cst_35 : f32 to vector<8x1xf32>
    %77 = arith.maximumf %75, %76 : vector<8x1xf32>
    %78 = math.rsqrt %77 : vector<8x1xf32>
    %79 = arith.mulf %71, %78 : vector<8x1xf32>
    %80 = tpu.iota {dimensions = array<i32: 1>} : vector<8x128xi32>
    %c4_i32 = arith.constant 4 : i32
    %81 = vector.broadcast %c4_i32 : i32 to vector<8x128xi32>
    %82 = arith.cmpi eq, %80, %81 : vector<8x128xi32>
    %cst_36 = arith.constant 0.000000e+00 : f32
    %83 = vector.shape_cast %74 : vector<8x1xf32> to vector<8x1xf32>
    %84 = vector.broadcast %83 : vector<8x1xf32> to vector<8x128xf32>
    %85 = vector.broadcast %cst_36 : f32 to vector<8x128xf32>
    %86 = arith.select %82, %84, %85 : vector<8x128xi1>, vector<8x128xf32>
    %87 = arith.addf %28, %86 : vector<8x128xf32>
    %c5_i32 = arith.constant 5 : i32
    %88 = vector.broadcast %c5_i32 : i32 to vector<8x128xi32>
    %89 = arith.cmpi eq, %80, %88 : vector<8x128xi32>
    %cst_37 = arith.constant 0.000000e+00 : f32
    %90 = vector.shape_cast %79 : vector<8x1xf32> to vector<8x1xf32>
    %91 = vector.broadcast %90 : vector<8x1xf32> to vector<8x128xf32>
    %92 = vector.broadcast %cst_37 : f32 to vector<8x128xf32>
    %93 = arith.select %89, %91, %92 : vector<8x128xi1>, vector<8x128xf32>
    %94 = arith.addf %87, %93 : vector<8x128xf32>
    %95 = vector.extract_strided_slice %94 {offsets = [0, 0], sizes = [8, 32], strides = [1, 1]} : vector<8x128xf32> to vector<8x32xf32>
    %c6 = arith.constant 6 : index
    %c0_38 = arith.constant 0 : index
    %c0_39 = arith.constant 0 : index
    %96 = vector.load %arg1[%c6, %c0_38, %c0_39] : memref<9x32x128xf32, #tpu.memory_space<vmem>>, vector<1x32x128xf32>
    %97 = vector.shape_cast %96 : vector<1x32x128xf32> to vector<32x128xf32>
    %cst_40 = arith.constant dense<0.000000e+00> : vector<8x128xf32>
    %98 = tpu.matmul %95, %97, %cst_40 {dimension_numbers = #tpu.dot_dimension_numbers<[1], [0], [0], [1], [0, 0, 1, 1], [], []>} : vector<8x32xf32>, vector<32x128xf32>, vector<8x128xf32> -> vector<8x128xf32>
    %c6_41 = arith.constant 6 : index
    %c0_42 = arith.constant 0 : index
    %99 = vector.load %arg2[%c6_41, %c0_42] : memref<9x128xf32, #tpu.memory_space<vmem>>, vector<1x128xf32>
    %100 = vector.shape_cast %99 : vector<1x128xf32> to vector<128xf32>
    %101 = vector.shape_cast %100 : vector<128xf32> to vector<1x128xf32>
    %102 = vector.broadcast %101 : vector<1x128xf32> to vector<8x128xf32>
    %103 = arith.addf %98, %102 : vector<8x128xf32>
    %104 = math.tanh %103 : vector<8x128xf32>
    %105 = vector.extract_strided_slice %104 {offsets = [0, 0], sizes = [8, 32], strides = [1, 1]} : vector<8x128xf32> to vector<8x32xf32>
    %c7 = arith.constant 7 : index
    %c0_43 = arith.constant 0 : index
    %c0_44 = arith.constant 0 : index
    %106 = vector.load %arg1[%c7, %c0_43, %c0_44] : memref<9x32x128xf32, #tpu.memory_space<vmem>>, vector<1x32x128xf32>
    %107 = vector.shape_cast %106 : vector<1x32x128xf32> to vector<32x128xf32>
    %cst_45 = arith.constant dense<0.000000e+00> : vector<8x128xf32>
    %108 = tpu.matmul %105, %107, %cst_45 {dimension_numbers = #tpu.dot_dimension_numbers<[1], [0], [0], [1], [0, 0, 1, 1], [], []>} : vector<8x32xf32>, vector<32x128xf32>, vector<8x128xf32> -> vector<8x128xf32>
    %c7_46 = arith.constant 7 : index
    %c0_47 = arith.constant 0 : index
    %109 = vector.load %arg2[%c7_46, %c0_47] : memref<9x128xf32, #tpu.memory_space<vmem>>, vector<1x128xf32>
    %110 = vector.shape_cast %109 : vector<1x128xf32> to vector<128xf32>
    %111 = vector.shape_cast %110 : vector<128xf32> to vector<1x128xf32>
    %112 = vector.broadcast %111 : vector<1x128xf32> to vector<8x128xf32>
    %113 = arith.addf %108, %112 : vector<8x128xf32>
    %114 = math.tanh %113 : vector<8x128xf32>
    %115 = vector.extract_strided_slice %114 {offsets = [0, 0], sizes = [8, 32], strides = [1, 1]} : vector<8x128xf32> to vector<8x32xf32>
    %c8 = arith.constant 8 : index
    %c0_48 = arith.constant 0 : index
    %c0_49 = arith.constant 0 : index
    %116 = vector.load %arg1[%c8, %c0_48, %c0_49] : memref<9x32x128xf32, #tpu.memory_space<vmem>>, vector<1x32x128xf32>
    %117 = vector.shape_cast %116 : vector<1x32x128xf32> to vector<32x128xf32>
    %cst_50 = arith.constant dense<0.000000e+00> : vector<8x128xf32>
    %118 = tpu.matmul %115, %117, %cst_50 {dimension_numbers = #tpu.dot_dimension_numbers<[1], [0], [0], [1], [0, 0, 1, 1], [], []>} : vector<8x32xf32>, vector<32x128xf32>, vector<8x128xf32> -> vector<8x128xf32>
    %c8_51 = arith.constant 8 : index
    %c0_52 = arith.constant 0 : index
    %119 = vector.load %arg2[%c8_51, %c0_52] : memref<9x128xf32, #tpu.memory_space<vmem>>, vector<1x128xf32>
    %120 = vector.shape_cast %119 : vector<1x128xf32> to vector<128xf32>
    %121 = vector.shape_cast %120 : vector<128xf32> to vector<1x128xf32>
    %122 = vector.broadcast %121 : vector<1x128xf32> to vector<8x128xf32>
    %123 = arith.addf %118, %122 : vector<8x128xf32>
    %c4_i32_53 = arith.constant 4 : i32
    %124 = vector.broadcast %c4_i32_53 : i32 to vector<8x128xi32>
    %125 = arith.cmpi slt, %80, %124 : vector<8x128xi32>
    %cst_54 = arith.constant -1.000000e+30 : f32
    %126 = vector.broadcast %cst_54 : f32 to vector<8x128xf32>
    %127 = arith.select %125, %123, %126 : vector<8x128xi1>, vector<8x128xf32>
    %cst_55 = arith.constant dense<0xFF800000> : vector<8xf32>
    %128 = vector.multi_reduction <maximumf>, %127, %cst_55 [1] : vector<8x128xf32> to vector<8xf32>
    %129 = vector.shape_cast %128 : vector<8xf32> to vector<8x1xf32>
    %130 = vector.broadcast %129 : vector<8x1xf32> to vector<8x128xf32>
    %131 = arith.subf %127, %130 : vector<8x128xf32>
    %132 = math.exp %131 : vector<8x128xf32>
    %cst_56 = arith.constant dense<0.000000e+00> : vector<8xf32>
    %133 = vector.multi_reduction <add>, %132, %cst_56 [1] : vector<8x128xf32> to vector<8xf32>
    %134 = vector.shape_cast %133 : vector<8xf32> to vector<8x1xf32>
    %135 = tpu.reciprocal %134 : vector<8x1xf32> -> vector<8x1xf32>
    %136 = vector.broadcast %135 : vector<8x1xf32> to vector<8x128xf32>
    %137 = arith.mulf %132, %136 : vector<8x128xf32>
    %c0_57 = arith.constant 0 : index
    %c0_58 = arith.constant 0 : index
    %c0_59 = arith.constant 0 : index
    %138 = vector.load %arg3[%c0_57, %c0_58, %c0_59] : memref<3x8x128xf32, #tpu.memory_space<vmem>>, vector<1x8x128xf32>
    %139 = vector.shape_cast %138 : vector<1x8x128xf32> to vector<8x128xf32>
    %140 = vector.shape_cast %57 : vector<8x128xf32> to vector<1x8x128xf32>
    tpu.vector_store %arg3[%c0_57, %c0_58, %c0_59], %140 {strides = array<i32>} : memref<3x8x128xf32, #tpu.memory_space<vmem>>, vector<1x8x128xf32>,
    %c1_60 = arith.constant 1 : index
    %c0_61 = arith.constant 0 : index
    %c0_62 = arith.constant 0 : index
    %141 = vector.load %arg3[%c1_60, %c0_61, %c0_62] : memref<3x8x128xf32, #tpu.memory_space<vmem>>, vector<1x8x128xf32>
    %142 = vector.shape_cast %141 : vector<1x8x128xf32> to vector<8x128xf32>
    %143 = vector.shape_cast %94 : vector<8x128xf32> to vector<1x8x128xf32>
    tpu.vector_store %arg3[%c1_60, %c0_61, %c0_62], %143 {strides = array<i32>} : memref<3x8x128xf32, #tpu.memory_space<vmem>>, vector<1x8x128xf32>,
    %c2_63 = arith.constant 2 : index
    %c0_64 = arith.constant 0 : index
    %c0_65 = arith.constant 0 : index
    %144 = vector.load %arg3[%c2_63, %c0_64, %c0_65] : memref<3x8x128xf32, #tpu.memory_space<vmem>>, vector<1x8x128xf32>
    %145 = vector.shape_cast %144 : vector<1x8x128xf32> to vector<8x128xf32>
    %146 = vector.shape_cast %137 : vector<8x128xf32> to vector<1x8x128xf32>
    tpu.vector_store %arg3[%c2_63, %c0_64, %c0_65], %146 {strides = array<i32>} : memref<3x8x128xf32, #tpu.memory_space<vmem>>, vector<1x8x128xf32>,
    return
  }
}

</mosaic_0001>

<llo_original>
// kernel: dagmm_forward.1
$region0: #{dagmm_forward.1}
  #allocation0 [shape = 'u32[]', space=smem, size = 0x4, offset = 0x4, fixed_abs, tag = 'smem constant byte address 0x4 - core index']
  #allocation1 [shape = 'u32[144,128]{1,0:T(1,128)}', space=vmem, size = 0x12000, scoped, tag = 'internal scratch']
  %s0 = inlined_call_operand.hbm [shape: f32[8,32], index: 0, kind: input, shape index: {}]
  %s1 = inlined_call_operand.hbm [shape: f32[9,32,128], index: 1, kind: input, shape index: {}]
  %s2 = inlined_call_operand.hbm [shape: f32[9,128], index: 2, kind: input, shape index: {}]
  %s3 = inlined_call_operand.vmem [shape: f32[3,8,128], index: 3, kind: output, shape index: {}]
  %s4 = sld [smem:[#allocation0]]
  $region34: #{dagmm_forward.1} parent=0
    _
  %s6 = ssub.s32 1, %s4
  %s7 = scalar_select 0, %s6, %s4
  $region1: #{dagmm_forward.1} parent=0
    #allocation2 [shape = 'u8[4096]{0}', space=vmem, size = 0x1000, scoped, tag = 'input window, operand 0, single buffered']
    #allocation3 [shape = 's32[1]{0}', space=sflag, size = 0x4, scoped, tag = 'scoped memory for dagmm_forward.1']
    #allocation4 [shape = 'u8[147456]{0}', space=vmem, size = 0x24000, scoped, tag = 'input window, operand 1, single buffered']
    #allocation5 [shape = 's32[1]{0}', space=sflag, size = 0x4, scoped, tag = 'scoped memory for dagmm_forward.1']
    #allocation6 [shape = 'u8[8192]{0}', space=vmem, size = 0x2000, scoped, tag = 'input window, operand 2, single buffered']
    %8 = vsyncpa [#allocation3], 0
    %9 = vsyncpa [#allocation5], 0
    // Predicated region
    $region2: #{dagmm_forward.1} parent=1 // pred_check
      _
    $region3: #{dagmm_forward.1} parent=1 // pred_check_branch
      %11 = sbr.rel (0) target = $region5
    $region4: #{dagmm_forward.1} parent=1 // pred_region
      %s13 = ssub.s32 128, 128
      %14 = vsyncadd [#allocation3], %s13
      %s16 = sshll.u32 [#allocation2], 4
      %s17 = int_to_ptr.vmem [resolvable:$true] %s16
      %19 = dma.hbm_to_vmem [thread:$0]  %s0, 128, %s17, [#allocation3]
    $region5: #{dagmm_forward.1} parent=1 // pred_fallthru
      _
    // Predicated region
    $region6: #{dagmm_forward.1} parent=1 // pred_check
      _
    $region7: #{dagmm_forward.1} parent=1 // pred_check_branch
      %21 = sbr.rel (0) target = $region9
    $region8: #{dagmm_forward.1} parent=1 // pred_region
      %s23 = ssub.s32 4608, 4608
      %24 = vsyncadd [#allocation5], %s23
      %s25 = sshll.u32 [#allocation4], 4
      %s26 = int_to_ptr.vmem [resolvable:$true] %s25
      %31 = dma.hbm_to_vmem [thread:$0]  %s1, 4608, %s26, [#allocation5], 128, 128, 8
    $region9: #{dagmm_forward.1} parent=1 // pred_fallthru
      _
    // Predicated region
    $region10: #{dagmm_forward.1} parent=1 // pred_check
      _
    $region11: #{dagmm_forward.1} parent=1 // pred_check_branch
      %33 = sbr.rel (0) target = $region13
    $region12: #{dagmm_forward.1} parent=1 // pred_region
      %s35 = ssub.s32 256, 256
      %36 = vsyncadd [#allocation5], %s35
      %s37 = sshll.u32 [#allocation6], 4
      %s38 = int_to_ptr.vmem [resolvable:$true] %s37
      %43 = dma.hbm_to_vmem [thread:$0]  %s2, 256, %s38, [#allocation5], 128, 128, 8
    $region13: #{dagmm_forward.1} parent=1 // pred_fallthru
      _
    // Predicated region
    $region14: #{dagmm_forward.1} parent=1 // pred_check
      _
    $region15: #{dagmm_forward.1} parent=1 // pred_check_branch
      %45 = sbr.rel (0) target = $region17
    $region16: #{dagmm_forward.1} parent=1 // pred_region
      %46 = dma.done [#allocation3], 128
    $region17: #{dagmm_forward.1} parent=1 // pred_fallthru
      _
    // Predicated region
    $region18: #{dagmm_forward.1} parent=1 // pred_check
      _
    $region19: #{dagmm_forward.1} parent=1 // pred_check_branch
      %48 = sbr.rel (0) target = $region21
    $region20: #{dagmm_forward.1} parent=1 // pred_region
      %49 = dma.done [#allocation5], 4608
    $region21: #{dagmm_forward.1} parent=1 // pred_fallthru
      _
    // Predicated region
    $region22: #{dagmm_forward.1} parent=1 // pred_check
      _
    $region23: #{dagmm_forward.1} parent=1 // pred_check_branch
      %51 = sbr.rel (0) target = $region25
    $region24: #{dagmm_forward.1} parent=1 // pred_region
      %52 = dma.done [#allocation5], 256
    $region25: #{dagmm_forward.1} parent=1 // pred_fallthru
      _
    %v53 = vld [vmem:[#allocation2] sm:$0xff]
    %v54 = vld [vmem:[#allocation4] sm:$0xff]
    %v55 = vld [vmem:[#allocation4 + $0x8] sm:$0xff]
    %v56 = vld [vmem:[#allocation4 + $0x10] sm:$0xff]
    %v57 = vld [vmem:[#allocation4 + $0x18] sm:$0xff]
    %v58 = vld [vmem:[#allocation6] sm:$0x1]
    %v59 = vlaneseq
    %v60 = vshrl.u32 %v59, 7
    %v61 = vsub.s32 0, %v60
    %v62 = vrot.slane %v58, %v61
    %vm63 = vcmask 261120
    %v65 = vsel %vm63, %v53, 0
    %67 = vmatprep.subr.mxu0 0.0
    %68 = vmatpush1.msra.mxu0 %v54
    %69 = vmatprep.subr.mxu0 0.0
    %70 = vmatpush1.msra.mxu0 %v55
    %71 = vmatprep.subr.mxu0 0.0
    %72 = vmatpush1.msra.mxu0 %v56
    %73 = vmatprep.subr.mxu0 0.0
    %74 = vmatpush1.msra.mxu0 %v57
    %75 = vmatprep.subr.mxu0 0.0
    %76 = vmatpush1.msra.mxu0 0.0
    %77 = vmatprep.subr.mxu0 0.0
    %78 = vmatpush1.msra.mxu0 0.0
    %79 = vmatprep.subr.mxu0 0.0
    %80 = vmatpush1.msra.mxu0 0.0
    %81 = vmatprep.subr.mxu0 0.0
    %82 = vmatpush1.msra.mxu0 0.0
    %83 = vmatprep.subr.mxu0 0.0
    %84 = vmatpush1.msra.mxu0 0.0
    %85 = vmatprep.subr.mxu0 0.0
    %86 = vmatpush1.msra.mxu0 0.0
    %87 = vmatprep.subr.mxu0 0.0
    %88 = vmatpush1.msra.mxu0 0.0
    %89 = vmatprep.subr.mxu0 0.0
    %90 = vmatpush1.msra.mxu0 0.0
    %91 = vmatprep.subr.mxu0 0.0
    %92 = vmatpush1.msra.mxu0 0.0
    %93 = vmatprep.subr.mxu0 0.0
    %94 = vmatpush1.msra.mxu0 0.0
    %95 = vmatprep.subr.mxu0 0.0
    %96 = vmatpush1.msra.mxu0 0.0
    %97 = vmatprep.subr.mxu0 0.0
    %98 = vmatpush1.msra.mxu0 0.0
    %99 = vmatprep.subr.mxu0 0.0
    %100 = vmatpush1.msra.mxu0 0.0
    %101 = vmatprep.subr.mxu0 0.0
    %102 = vmatpush1.msra.mxu0 0.0
    %103 = vmatprep.subr.mxu0 0.0
    %104 = vmatpush1.msra.mxu0 0.0
    %105 = vmatprep.subr.mxu0 0.0
    %106 = vmatpush1.msra.mxu0 0.0
    %107 = vmatprep.subr.mxu0 0.0
    %108 = vmatpush1.msra.mxu0 0.0
    %109 = vmatprep.subr.mxu0 0.0
    %110 = vmatpush1.msra.mxu0 0.0
    %111 = vmatprep.subr.mxu0 0.0
    %112 = vmatpush1.msra.mxu0 0.0
    %113 = vmatprep.subr.mxu0 0.0
    %114 = vmatpush1.msra.mxu0 0.0
    %115 = vmatprep.subr.mxu0 0.0
    %116 = vmatpush1.msra.mxu0 0.0
    %117 = vmatprep.subr.mxu0 0.0
    %118 = vmatpush1.msra.mxu0 0.0
    %119 = vmatprep.subr.mxu0 0.0
    %120 = vmatpush1.msra.mxu0 0.0
    %121 = vmatprep.subr.mxu0 0.0
    %122 = vmatpush1.msra.mxu0 0.0
    %123 = vmatprep.subr.mxu0 0.0
    %124 = vmatpush1.msra.mxu0 0.0
    %125 = vmatprep.subr.mxu0 0.0
    %126 = vmatpush1.msra.mxu0 0.0
    %127 = vmatprep.subr.mxu0 0.0
    %128 = vmatpush1.msra.mxu0 0.0
    %129 = vmatprep.subr.mxu0 0.0
    %130 = vmatpush1.msra.mxu0 0.0
    %131 = vmatprep.mubr.f32.mxu0 0.0
    %132 = vmatmul.mubr.f32.gmra.mrb[0].mxu0 %v65
    %v133 = vpop.f32.mrb[0].mxu0
    %v134 = vadd.f32 %v62, %v133
    %v135 = vpop.f32.mrb[0].mxu0
    %136 = vdwg.mxu0
    %v137 = vtanh.pop %v134
    %s138 = scalar_lea.vmem [#allocation4], 32
    %v139 = vld [vmem:[%s138] sm:$0xff]
    %v140 = vld [vmem:[%s138 + $0x8] sm:$0xff]
    %v141 = vld [vmem:[%s138 + $0x10] sm:$0xff]
    %v142 = vld [vmem:[%s138 + $0x18] sm:$0xff]
    %v143 = vld [vmem:[#allocation6 + $0x1] sm:$0x1]
    %v144 = vlaneseq
    %v145 = vshrl.u32 %v144, 7
    %v146 = vsub.s32 0, %v145
    %v147 = vrot.slane %v143, %v146
    %v149 = vsel %vm63, %v137, 0
    %151 = vmatprep.subr.mxu0 0.0
    %152 = vmatpush1.msra.mxu0 %v139
    %153 = vmatprep.subr.mxu0 0.0
    %154 = vmatpush1.msra.mxu0 %v140
    %155 = vmatprep.subr.mxu0 0.0
    %156 = vmatpush1.msra.mxu0 %v141
    %157 = vmatprep.subr.mxu0 0.0
    %158 = vmatpush1.msra.mxu0 %v142
    %159 = vmatprep.subr.mxu0 0.0
    %160 = vmatpush1.msra.mxu0 0.0
    %161 = vmatprep.subr.mxu0 0.0
    %162 = vmatpush1.msra.mxu0 0.0
    %163 = vmatprep.subr.mxu0 0.0
    %164 = vmatpush1.msra.mxu0 0.0
    %165 = vmatprep.subr.mxu0 0.0
    %166 = vmatpush1.msra.mxu0 0.0
    %167 = vmatprep.subr.mxu0 0.0
    %168 = vmatpush1.msra.mxu0 0.0
    %169 = vmatprep.subr.mxu0 0.0
    %170 = vmatpush1.msra.mxu0 0.0
    %171 = vmatprep.subr.mxu0 0.0
    %172 = vmatpush1.msra.mxu0 0.0
    %173 = vmatprep.subr.mxu0 0.0
    %174 = vmatpush1.msra.mxu0 0.0
    %175 = vmatprep.subr.mxu0 0.0
    %176 = vmatpush1.msra.mxu0 0.0
    %177 = vmatprep.subr.mxu0 0.0
    %178 = vmatpush1.msra.mxu0 0.0
    %179 = vmatprep.subr.mxu0 0.0
    %180 = vmatpush1.msra.mxu0 0.0
    %181 = vmatprep.subr.mxu0 0.0
    %182 = vmatpush1.msra.mxu0 0.0
    %183 = vmatprep.subr.mxu0 0.0
    %184 = vmatpush1.msra.mxu0 0.0
    %185 = vmatprep.subr.mxu0 0.0
    %186 = vmatpush1.msra.mxu0 0.0
    %187 = vmatprep.subr.mxu0 0.0
    %188 = vmatpush1.msra.mxu0 0.0
    %189 = vmatprep.subr.mxu0 0.0
    %190 = vmatpush1.msra.mxu0 0.0
    %191 = vmatprep.subr.mxu0 0.0
    %192 = vmatpush1.msra.mxu0 0.0
    %193 = vmatprep.subr.mxu0 0.0
    %194 = vmatpush1.msra.mxu0 0.0
    %195 = vmatprep.subr.mxu0 0.0
    %196 = vmatpush1.msra.mxu0 0.0
    %197 = vmatprep.subr.mxu0 0.0
    %198 = vmatpush1.msra.mxu0 0.0
    %199 = vmatprep.subr.mxu0 0.0
    %200 = vmatpush1.msra.mxu0 0.0
    %201 = vmatprep.subr.mxu0 0.0
    %202 = vmatpush1.msra.mxu0 0.0
    %203 = vmatprep.subr.mxu0 0.0
    %204 = vmatpush1.msra.mxu0 0.0
    %205 = vmatprep.subr.mxu0 0.0
    %206 = vmatpush1.msra.mxu0 0.0
    %207 = vmatprep.subr.mxu0 0.0
    %208 = vmatpush1.msra.mxu0 0.0
    %209 = vmatprep.subr.mxu0 0.0
    %210 = vmatpush1.msra.mxu0 0.0
    %211 = vmatprep.subr.mxu0 0.0
    %212 = vmatpush1.msra.mxu0 0.0
    %213 = vmatprep.subr.mxu0 0.0
    %214 = vmatpush1.msra.mxu0 0.0
    %215 = vmatprep.mubr.f32.mxu0 0.0
    %216 = vmatmul.mubr.f32.gmra.mrb[0].mxu0 %v149
    %v217 = vpop.f32.mrb[0].mxu0
    %v218 = vadd.f32 %v147, %v217
    %v219 = vpop.f32.mrb[0].mxu0
    %220 = vdwg.mxu0
    %v221 = vtanh.pop %v218
    %s222 = scalar_lea.vmem [#allocation4], 64
    %v223 = vld [vmem:[%s222] sm:$0xff]
    %v224 = vld [vmem:[%s222 + $0x8] sm:$0xff]
    %v225 = vld [vmem:[%s222 + $0x10] sm:$0xff]
    %v226 = vld [vmem:[%s222 + $0x18] sm:$0xff]
    %v227 = vld [vmem:[#allocation6 + $0x2] sm:$0x1]
    %v228 = vlaneseq
    %v229 = vshrl.u32 %v228, 7
    %v230 = vsub.s32 0, %v229
    %v231 = vrot.slane %v227, %v230
    %v233 = vsel %vm63, %v221, 0
    %235 = vmatprep.subr.mxu0 0.0
    %236 = vmatpush1.msra.mxu0 %v223
    %237 = vmatprep.subr.mxu0 0.0
    %238 = vmatpush1.msra.mxu0 %v224
    %239 = vmatprep.subr.mxu0 0.0
    %240 = vmatpush1.msra.mxu0 %v225
    %241 = vmatprep.subr.mxu0 0.0
    %242 = vmatpush1.msra.mxu0 %v226
    %243 = vmatprep.subr.mxu0 0.0
    %244 = vmatpush1.msra.mxu0 0.0
    %245 = vmatprep.subr.mxu0 0.0
    %246 = vmatpush1.msra.mxu0 0.0
    %247 = vmatprep.subr.mxu0 0.0
    %248 = vmatpush1.msra.mxu0 0.0
    %249 = vmatprep.subr.mxu0 0.0
    %250 = vmatpush1.msra.mxu0 0.0
    %251 = vmatprep.subr.mxu0 0.0
    %252 = vmatpush1.msra.mxu0 0.0
    %253 = vmatprep.subr.mxu0 0.0
    %254 = vmatpush1.msra.mxu0 0.0
    %255 = vmatprep.subr.mxu0 0.0
    %256 = vmatpush1.msra.mxu0 0.0
    %257 = vmatprep.subr.mxu0 0.0
    %258 = vmatpush1.msra.mxu0 0.0
    %259 = vmatprep.subr.mxu0 0.0
    %260 = vmatpush1.msra.mxu0 0.0
    %261 = vmatprep.subr.mxu0 0.0
    %262 = vmatpush1.msra.mxu0 0.0
    %263 = vmatprep.subr.mxu0 0.0
    %264 = vmatpush1.msra.mxu0 0.0
    %265 = vmatprep.subr.mxu0 0.0
    %266 = vmatpush1.msra.mxu0 0.0
    %267 = vmatprep.subr.mxu0 0.0
    %268 = vmatpush1.msra.mxu0 0.0
    %269 = vmatprep.subr.mxu0 0.0
    %270 = vmatpush1.msra.mxu0 0.0
    %271 = vmatprep.subr.mxu0 0.0
    %272 = vmatpush1.msra.mxu0 0.0
    %273 = vmatprep.subr.mxu0 0.0
    %274 = vmatpush1.msra.mxu0 0.0
    %275 = vmatprep.subr.mxu0 0.0
    %276 = vmatpush1.msra.mxu0 0.0
    %277 = vmatprep.subr.mxu0 0.0
    %278 = vmatpush1.msra.mxu0 0.0
    %279 = vmatprep.subr.mxu0 0.0
    %280 = vmatpush1.msra.mxu0 0.0
    %281 = vmatprep.subr.mxu0 0.0
    %282 = vmatpush1.msra.mxu0 0.0
    %283 = vmatprep.subr.mxu0 0.0
    %284 = vmatpush1.msra.mxu0 0.0
    %285 = vmatprep.subr.mxu0 0.0
    %286 = vmatpush1.msra.mxu0 0.0
    %287 = vmatprep.subr.mxu0 0.0
    %288 = vmatpush1.msra.mxu0 0.0
    %289 = vmatprep.subr.mxu0 0.0
    %290 = vmatpush1.msra.mxu0 0.0
    %291 = vmatprep.subr.mxu0 0.0
    %292 = vmatpush1.msra.mxu0 0.0
    %293 = vmatprep.subr.mxu0 0.0
    %294 = vmatpush1.msra.mxu0 0.0
    %295 = vmatprep.subr.mxu0 0.0
    %296 = vmatpush1.msra.mxu0 0.0
    %297 = vmatprep.subr.mxu0 0.0
    %298 = vmatpush1.msra.mxu0 0.0
    %299 = vmatprep.mubr.f32.mxu0 0.0
    %300 = vmatmul.mubr.f32.gmra.mrb[0].mxu0 %v233
    %v301 = vpop.f32.mrb[0].mxu0
    %v302 = vadd.f32 %v231, %v301
    %v303 = vpop.f32.mrb[0].mxu0
    %304 = vdwg.mxu0
    %s305 = scalar_lea.vmem [#allocation4], 96
    %v306 = vld [vmem:[%s305] sm:$0xff]
    %v307 = vld [vmem:[%s305 + $0x8] sm:$0xff]
    %v308 = vld [vmem:[%s305 + $0x10] sm:$0xff]
    %v309 = vld [vmem:[%s305 + $0x18] sm:$0xff]
    %v310 = vld [vmem:[#allocation6 + $0x3] sm:$0x1]
    %v311 = vlaneseq
    %v312 = vshrl.u32 %v311, 7
    %v313 = vsub.s32 0, %v312
    %v314 = vrot.slane %v310, %v313
    %v316 = vsel %vm63, %v302, 0
    %318 = vmatprep.subr.mxu0 0.0
    %319 = vmatpush1.msra.mxu0 %v306
    %320 = vmatprep.subr.mxu0 0.0
    %321 = vmatpush1.msra.mxu0 %v307
    %322 = vmatprep.subr.mxu0 0.0
    %323 = vmatpush1.msra.mxu0 %v308
    %324 = vmatprep.subr.mxu0 0.0
    %325 = vmatpush1.msra.mxu0 %v309
    %326 = vmatprep.subr.mxu0 0.0
    %327 = vmatpush1.msra.mxu0 0.0
    %328 = vmatprep.subr.mxu0 0.0
    %329 = vmatpush1.msra.mxu0 0.0
    %330 = vmatprep.subr.mxu0 0.0
    %331 = vmatpush1.msra.mxu0 0.0
    %332 = vmatprep.subr.mxu0 0.0
    %333 = vmatpush1.msra.mxu0 0.0
    %334 = vmatprep.subr.mxu0 0.0
    %335 = vmatpush1.msra.mxu0 0.0
    %336 = vmatprep.subr.mxu0 0.0
    %337 = vmatpush1.msra.mxu0 0.0
    %338 = vmatprep.subr.mxu0 0.0
    %339 = vmatpush1.msra.mxu0 0.0
    %340 = vmatprep.subr.mxu0 0.0
    %341 = vmatpush1.msra.mxu0 0.0
    %342 = vmatprep.subr.mxu0 0.0
    %343 = vmatpush1.msra.mxu0 0.0
    %344 = vmatprep.subr.mxu0 0.0
    %345 = vmatpush1.msra.mxu0 0.0
    %346 = vmatprep.subr.mxu0 0.0
    %347 = vmatpush1.msra.mxu0 0.0
    %348 = vmatprep.subr.mxu0 0.0
    %349 = vmatpush1.msra.mxu0 0.0
    %350 = vmatprep.subr.mxu0 0.0
    %351 = vmatpush1.msra.mxu0 0.0
    %352 = vmatprep.subr.mxu0 0.0
    %353 = vmatpush1.msra.mxu0 0.0
    %354 = vmatprep.subr.mxu0 0.0
    %355 = vmatpush1.msra.mxu0 0.0
    %356 = vmatprep.subr.mxu0 0.0
    %357 = vmatpush1.msra.mxu0 0.0
    %358 = vmatprep.subr.mxu0 0.0
    %359 = vmatpush1.msra.mxu0 0.0
    %360 = vmatprep.subr.mxu0 0.0
    %361 = vmatpush1.msra.mxu0 0.0
    %362 = vmatprep.subr.mxu0 0.0
    %363 = vmatpush1.msra.mxu0 0.0
    %364 = vmatprep.subr.mxu0 0.0
    %365 = vmatpush1.msra.mxu0 0.0
    %366 = vmatprep.subr.mxu0 0.0
    %367 = vmatpush1.msra.mxu0 0.0
    %368 = vmatprep.subr.mxu0 0.0
    %369 = vmatpush1.msra.mxu0 0.0
    %370 = vmatprep.subr.mxu0 0.0
    %371 = vmatpush1.msra.mxu0 0.0
    %372 = vmatprep.subr.mxu0 0.0
    %373 = vmatpush1.msra.mxu0 0.0
    %374 = vmatprep.subr.mxu0 0.0
    %375 = vmatpush1.msra.mxu0 0.0
    %376 = vmatprep.subr.mxu0 0.0
    %377 = vmatpush1.msra.mxu0 0.0
    %378 = vmatprep.subr.mxu0 0.0
    %379 = vmatpush1.msra.mxu0 0.0
    %380 = vmatprep.subr.mxu0 0.0
    %381 = vmatpush1.msra.mxu0 0.0
    %382 = vmatprep.mubr.f32.mxu0 0.0
    %383 = vmatmul.mubr.f32.gmra.mrb[0].mxu0 %v316
    %v384 = vpop.f32.mrb[0].mxu0
    %v385 = vadd.f32 %v314, %v384
    %v386 = vpop.f32.mrb[0].mxu0
    %387 = vdwg.mxu0
    %v388 = vtanh.pop %v385
    %s389 = scalar_lea.vmem [#allocation4], 128
    %v390 = vld [vmem:[%s389] sm:$0xff]
    %v391 = vld [vmem:[%s389 + $0x8] sm:$0xff]
    %v392 = vld [vmem:[%s389 + $0x10] sm:$0xff]
    %v393 = vld [vmem:[%s389 + $0x18] sm:$0xff]
    %v394 = vld [vmem:[#allocation6 + $0x4] sm:$0x1]
    %v395 = vlaneseq
    %v396 = vshrl.u32 %v395, 7
    %v397 = vsub.s32 0, %v396
    %v398 = vrot.slane %v394, %v397
    %v400 = vsel %vm63, %v388, 0
    %402 = vmatprep.subr.mxu0 0.0
    %403 = vmatpush1.msra.mxu0 %v390
    %404 = vmatprep.subr.mxu0 0.0
    %405 = vmatpush1.msra.mxu0 %v391
    %406 = vmatprep.subr.mxu0 0.0
    %407 = vmatpush1.msra.mxu0 %v392
    %408 = vmatprep.subr.mxu0 0.0
    %409 = vmatpush1.msra.mxu0 %v393
    %410 = vmatprep.subr.mxu0 0.0
    %411 = vmatpush1.msra.mxu0 0.0
    %412 = vmatprep.subr.mxu0 0.0
    %413 = vmatpush1.msra.mxu0 0.0
    %414 = vmatprep.subr.mxu0 0.0
    %415 = vmatpush1.msra.mxu0 0.0
    %416 = vmatprep.subr.mxu0 0.0
    %417 = vmatpush1.msra.mxu0 0.0
    %418 = vmatprep.subr.mxu0 0.0
    %419 = vmatpush1.msra.mxu0 0.0
    %420 = vmatprep.subr.mxu0 0.0
    %421 = vmatpush1.msra.mxu0 0.0
    %422 = vmatprep.subr.mxu0 0.0
    %423 = vmatpush1.msra.mxu0 0.0
    %424 = vmatprep.subr.mxu0 0.0
    %425 = vmatpush1.msra.mxu0 0.0
    %426 = vmatprep.subr.mxu0 0.0
    %427 = vmatpush1.msra.mxu0 0.0
    %428 = vmatprep.subr.mxu0 0.0
    %429 = vmatpush1.msra.mxu0 0.0
    %430 = vmatprep.subr.mxu0 0.0
    %431 = vmatpush1.msra.mxu0 0.0
    %432 = vmatprep.subr.mxu0 0.0
    %433 = vmatpush1.msra.mxu0 0.0
    %434 = vmatprep.subr.mxu0 0.0
    %435 = vmatpush1.msra.mxu0 0.0
    %436 = vmatprep.subr.mxu0 0.0
    %437 = vmatpush1.msra.mxu0 0.0
    %438 = vmatprep.subr.mxu0 0.0
    %439 = vmatpush1.msra.mxu0 0.0
    %440 = vmatprep.subr.mxu0 0.0
    %441 = vmatpush1.msra.mxu0 0.0
    %442 = vmatprep.subr.mxu0 0.0
    %443 = vmatpush1.msra.mxu0 0.0
    %444 = vmatprep.subr.mxu0 0.0
    %445 = vmatpush1.msra.mxu0 0.0
    %446 = vmatprep.subr.mxu0 0.0
    %447 = vmatpush1.msra.mxu0 0.0
    %448 = vmatprep.subr.mxu0 0.0
    %449 = vmatpush1.msra.mxu0 0.0
    %450 = vmatprep.subr.mxu0 0.0
    %451 = vmatpush1.msra.mxu0 0.0
    %452 = vmatprep.subr.mxu0 0.0
    %453 = vmatpush1.msra.mxu0 0.0
    %454 = vmatprep.subr.mxu0 0.0
    %455 = vmatpush1.msra.mxu0 0.0
    %456 = vmatprep.subr.mxu0 0.0
    %457 = vmatpush1.msra.mxu0 0.0
    %458 = vmatprep.subr.mxu0 0.0
    %459 = vmatpush1.msra.mxu0 0.0
    %460 = vmatprep.subr.mxu0 0.0
    %461 = vmatpush1.msra.mxu0 0.0
    %462 = vmatprep.subr.mxu0 0.0
    %463 = vmatpush1.msra.mxu0 0.0
    %464 = vmatprep.subr.mxu0 0.0
    %465 = vmatpush1.msra.mxu0 0.0
    %466 = vmatprep.mubr.f32.mxu0 0.0
    %467 = vmatmul.mubr.f32.gmra.mrb[0].mxu0 %v400
    %v468 = vpop.f32.mrb[0].mxu0
    %v469 = vadd.f32 %v398, %v468
    %v470 = vpop.f32.mrb[0].mxu0
    %471 = vdwg.mxu0
    %v472 = vtanh.pop %v469
    %s473 = scalar_lea.vmem [#allocation4], 160
    %v474 = vld [vmem:[%s473] sm:$0xff]
    %v475 = vld [vmem:[%s473 + $0x8] sm:$0xff]
    %v476 = vld [vmem:[%s473 + $0x10] sm:$0xff]
    %v477 = vld [vmem:[%s473 + $0x18] sm:$0xff]
    %v478 = vld [vmem:[#allocation6 + $0x5] sm:$0x1]
    %v479 = vlaneseq
    %v480 = vshrl.u32 %v479, 7
    %v481 = vsub.s32 0, %v480
    %v482 = vrot.slane %v478, %v481
    %v484 = vsel %vm63, %v472, 0
    %486 = vmatprep.subr.mxu0 0.0
    %487 = vmatpush1.msra.mxu0 %v474
    %488 = vmatprep.subr.mxu0 0.0
    %489 = vmatpush1.msra.mxu0 %v475
    %490 = vmatprep.subr.mxu0 0.0
    %491 = vmatpush1.msra.mxu0 %v476
    %492 = vmatprep.subr.mxu0 0.0
    %493 = vmatpush1.msra.mxu0 %v477
    %494 = vmatprep.subr.mxu0 0.0
    %495 = vmatpush1.msra.mxu0 0.0
    %496 = vmatprep.subr.mxu0 0.0
    %497 = vmatpush1.msra.mxu0 0.0
    %498 = vmatprep.subr.mxu0 0.0
    %499 = vmatpush1.msra.mxu0 0.0
    %500 = vmatprep.subr.mxu0 0.0
    %501 = vmatpush1.msra.mxu0 0.0
    %502 = vmatprep.subr.mxu0 0.0
    %503 = vmatpush1.msra.mxu0 0.0
    %504 = vmatprep.subr.mxu0 0.0
    %505 = vmatpush1.msra.mxu0 0.0
    %506 = vmatprep.subr.mxu0 0.0
    %507 = vmatpush1.msra.mxu0 0.0
    %508 = vmatprep.subr.mxu0 0.0
    %509 = vmatpush1.msra.mxu0 0.0
    %510 = vmatprep.subr.mxu0 0.0
    %511 = vmatpush1.msra.mxu0 0.0
    %512 = vmatprep.subr.mxu0 0.0
    %513 = vmatpush1.msra.mxu0 0.0
    %514 = vmatprep.subr.mxu0 0.0
    %515 = vmatpush1.msra.mxu0 0.0
    %516 = vmatprep.subr.mxu0 0.0
    %517 = vmatpush1.msra.mxu0 0.0
    %518 = vmatprep.subr.mxu0 0.0
    %519 = vmatpush1.msra.mxu0 0.0
    %520 = vmatprep.subr.mxu0 0.0
    %521 = vmatpush1.msra.mxu0 0.0
    %522 = vmatprep.subr.mxu0 0.0
    %523 = vmatpush1.msra.mxu0 0.0
    %524 = vmatprep.subr.mxu0 0.0
    %525 = vmatpush1.msra.mxu0 0.0
    %526 = vmatprep.subr.mxu0 0.0
    %527 = vmatpush1.msra.mxu0 0.0
    %528 = vmatprep.subr.mxu0 0.0
    %529 = vmatpush1.msra.mxu0 0.0
    %530 = vmatprep.subr.mxu0 0.0
    %531 = vmatpush1.msra.mxu0 0.0
    %532 = vmatprep.subr.mxu0 0.0
    %533 = vmatpush1.msra.mxu0 0.0
    %534 = vmatprep.subr.mxu0 0.0
    %535 = vmatpush1.msra.mxu0 0.0
    %536 = vmatprep.subr.mxu0 0.0
    %537 = vmatpush1.msra.mxu0 0.0
    %538 = vmatprep.subr.mxu0 0.0
    %539 = vmatpush1.msra.mxu0 0.0
    %540 = vmatprep.subr.mxu0 0.0
    %541 = vmatpush1.msra.mxu0 0.0
    %542 = vmatprep.subr.mxu0 0.0
    %543 = vmatpush1.msra.mxu0 0.0
    %544 = vmatprep.subr.mxu0 0.0
    %545 = vmatpush1.msra.mxu0 0.0
    %546 = vmatprep.subr.mxu0 0.0
    %547 = vmatpush1.msra.mxu0 0.0
    %548 = vmatprep.subr.mxu0 0.0
    %549 = vmatpush1.msra.mxu0 0.0
    %550 = vmatprep.mubr.f32.mxu0 0.0
    %551 = vmatmul.mubr.f32.gmra.mrb[0].mxu0 %v484
    %v552 = vpop.f32.mrb[0].mxu0
    %v553 = vadd.f32 %v482, %v552
    %v554 = vpop.f32.mrb[0].mxu0
    %555 = vdwg.mxu0
    %v556 = vsub.f32 %v53, %v553
    %v557 = vmul.f32 %v53, %v53
    %v558 = vsel %vm63, %v557, 0.0
    %559 = vadd.xlane.f32.xlu0 %v558
    %v560 = vpop.xlane.xlu0 %559
    %v561 = vmul.f32 %v556, %v556
    %v562 = vsel %vm63, %v561, 0.0
    %563 = vadd.xlane.f32.xlu0 %v562
    %v564 = vpop.xlane.xlu0 %563
    %v565 = vmul.f32 %v553, %v553
    %v566 = vsel %vm63, %v565, 0.0
    %567 = vadd.xlane.f32.xlu0 %v566
    %v568 = vpop.xlane.xlu0 %567
    %v569 = vmul.f32 %v53, %v553
    %v570 = vsel %vm63, %v569, 0.0
    %571 = vadd.xlane.f32.xlu0 %v570
    %v572 = vpop.xlane.xlu0 %571
    %v573 = vrsqrt.pop %v564
    %v574 = vmul.f32 %v564, %v573
    %vm575 = vcmp.eq.f32.partialorder %v564, inf
    %v576 = vsel %vm575, %v564, %v574
    %vm577 = vcmp.eq.f32.partialorder %v564, 0.0
    %v578 = vand.u32 %v564, 2147483648
    %v579 = vsel %vm577, %v578, %v576
    %v580 = vrsqrt.pop %v560
    %v581 = vmul.f32 %v579, %v580
    %v582 = vmul.f32 %v560, %v568
    %v583 = vmax.f32 %v582, 1e-16
    %v584 = vrsqrt.pop %v583
    %v585 = vmul.f32 %v572, %v584
    %v586 = vlaneseq
    %v587 = vand.u32 %v586, 127
    %vm588 = vcmp.eq.s32.totalorder %v587, 4
    %v589 = vsel %vm588, %v581, 0.0
    %v590 = vadd.f32 %v302, %v589
    %vm591 = vcmp.eq.s32.totalorder %v587, 5
    %v592 = vsel %vm591, %v585, 0.0
    %v593 = vadd.f32 %v590, %v592
    %s594 = scalar_lea.vmem [#allocation4], 192
    %v595 = vld [vmem:[%s594] sm:$0xff]
    %v596 = vld [vmem:[%s594 + $0x8] sm:$0xff]
    %v597 = vld [vmem:[%s594 + $0x10] sm:$0xff]
    %v598 = vld [vmem:[%s594 + $0x18] sm:$0xff]
    %v599 = vld [vmem:[#allocation6 + $0x6] sm:$0x1]
    %v600 = vlaneseq
    %v601 = vshrl.u32 %v600, 7
    %v602 = vsub.s32 0, %v601
    %v603 = vrot.slane %v599, %v602
    %v605 = vsel %vm63, %v593, 0
    %607 = vmatprep.subr.mxu0 0.0
    %608 = vmatpush1.msra.mxu0 %v595
    %609 = vmatprep.subr.mxu0 0.0
    %610 = vmatpush1.msra.mxu0 %v596
    %611 = vmatprep.subr.mxu0 0.0
    %612 = vmatpush1.msra.mxu0 %v597
    %613 = vmatprep.subr.mxu0 0.0
    %614 = vmatpush1.msra.mxu0 %v598
    %615 = vmatprep.subr.mxu0 0.0
    %616 = vmatpush1.msra.mxu0 0.0
    %617 = vmatprep.subr.mxu0 0.0
    %618 = vmatpush1.msra.mxu0 0.0
    %619 = vmatprep.subr.mxu0 0.0
    %620 = vmatpush1.msra.mxu0 0.0
    %621 = vmatprep.subr.mxu0 0.0
    %622 = vmatpush1.msra.mxu0 0.0
    %623 = vmatprep.subr.mxu0 0.0
    %624 = vmatpush1.msra.mxu0 0.0
    %625 = vmatprep.subr.mxu0 0.0
    %626 = vmatpush1.msra.mxu0 0.0
    %627 = vmatprep.subr.mxu0 0.0
    %628 = vmatpush1.msra.mxu0 0.0
    %629 = vmatprep.subr.mxu0 0.0
    %630 = vmatpush1.msra.mxu0 0.0
    %631 = vmatprep.subr.mxu0 0.0
    %632 = vmatpush1.msra.mxu0 0.0
    %633 = vmatprep.subr.mxu0 0.0
    %634 = vmatpush1.msra.mxu0 0.0
    %635 = vmatprep.subr.mxu0 0.0
    %636 = vmatpush1.msra.mxu0 0.0
    %637 = vmatprep.subr.mxu0 0.0
    %638 = vmatpush1.msra.mxu0 0.0
    %639 = vmatprep.subr.mxu0 0.0
    %640 = vmatpush1.msra.mxu0 0.0
    %641 = vmatprep.subr.mxu0 0.0
    %642 = vmatpush1.msra.mxu0 0.0
    %643 = vmatprep.subr.mxu0 0.0
    %644 = vmatpush1.msra.mxu0 0.0
    %645 = vmatprep.subr.mxu0 0.0
    %646 = vmatpush1.msra.mxu0 0.0
    %647 = vmatprep.subr.mxu0 0.0
    %648 = vmatpush1.msra.mxu0 0.0
    %649 = vmatprep.subr.mxu0 0.0
    %650 = vmatpush1.msra.mxu0 0.0
    %651 = vmatprep.subr.mxu0 0.0
    %652 = vmatpush1.msra.mxu0 0.0
    %653 = vmatprep.subr.mxu0 0.0
    %654 = vmatpush1.msra.mxu0 0.0
    %655 = vmatprep.subr.mxu0 0.0
    %656 = vmatpush1.msra.mxu0 0.0
    %657 = vmatprep.subr.mxu0 0.0
    %658 = vmatpush1.msra.mxu0 0.0
    %659 = vmatprep.subr.mxu0 0.0
    %660 = vmatpush1.msra.mxu0 0.0
    %661 = vmatprep.subr.mxu0 0.0
    %662 = vmatpush1.msra.mxu0 0.0
    %663 = vmatprep.subr.mxu0 0.0
    %664 = vmatpush1.msra.mxu0 0.0
    %665 = vmatprep.subr.mxu0 0.0
    %666 = vmatpush1.msra.mxu0 0.0
    %667 = vmatprep.subr.mxu0 0.0
    %668 = vmatpush1.msra.mxu0 0.0
    %669 = vmatprep.subr.mxu0 0.0
    %670 = vmatpush1.msra.mxu0 0.0
    %671 = vmatprep.mubr.f32.mxu0 0.0
    %672 = vmatmul.mubr.f32.gmra.mrb[0].mxu0 %v605
    %v673 = vpop.f32.mrb[0].mxu0
    %v674 = vadd.f32 %v603, %v673
    %v675 = vpop.f32.mrb[0].mxu0
    %676 = vdwg.mxu0
    %v677 = vtanh.pop %v674
    %s678 = scalar_lea.vmem [#allocation4], 224
    %v679 = vld [vmem:[%s678] sm:$0xff]
    %v680 = vld [vmem:[%s678 + $0x8] sm:$0xff]
    %v681 = vld [vmem:[%s678 + $0x10] sm:$0xff]
    %v682 = vld [vmem:[%s678 + $0x18] sm:$0xff]
    %v683 = vld [vmem:[#allocation6 + $0x7] sm:$0x1]
    %v684 = vlaneseq
    %v685 = vshrl.u32 %v684, 7
    %v686 = vsub.s32 0, %v685
    %v687 = vrot.slane %v683, %v686
    %v689 = vsel %vm63, %v677, 0
    %691 = vmatprep.subr.mxu0 0.0
    %692 = vmatpush1.msra.mxu0 %v679
    %693 = vmatprep.subr.mxu0 0.0
    %694 = vmatpush1.msra.mxu0 %v680
    %695 = vmatprep.subr.mxu0 0.0
    %696 = vmatpush1.msra.mxu0 %v681
    %697 = vmatprep.subr.mxu0 0.0
    %698 = vmatpush1.msra.mxu0 %v682
    %699 = vmatprep.subr.mxu0 0.0
    %700 = vmatpush1.msra.mxu0 0.0
    %701 = vmatprep.subr.mxu0 0.0
    %702 = vmatpush1.msra.mxu0 0.0
    %703 = vmatprep.subr.mxu0 0.0
    %704 = vmatpush1.msra.mxu0 0.0
    %705 = vmatprep.subr.mxu0 0.0
    %706 = vmatpush1.msra.mxu0 0.0
    %707 = vmatprep.subr.mxu0 0.0
    %708 = vmatpush1.msra.mxu0 0.0
    %709 = vmatprep.subr.mxu0 0.0
    %710 = vmatpush1.msra.mxu0 0.0
    %711 = vmatprep.subr.mxu0 0.0
    %712 = vmatpush1.msra.mxu0 0.0
    %713 = vmatprep.subr.mxu0 0.0
    %714 = vmatpush1.msra.mxu0 0.0
    %715 = vmatprep.subr.mxu0 0.0
    %716 = vmatpush1.msra.mxu0 0.0
    %717 = vmatprep.subr.mxu0 0.0
    %718 = vmatpush1.msra.mxu0 0.0
    %719 = vmatprep.subr.mxu0 0.0
    %720 = vmatpush1.msra.mxu0 0.0
    %721 = vmatprep.subr.mxu0 0.0
    %722 = vmatpush1.msra.mxu0 0.0
    %723 = vmatprep.subr.mxu0 0.0
    %724 = vmatpush1.msra.mxu0 0.0
    %725 = vmatprep.subr.mxu0 0.0
    %726 = vmatpush1.msra.mxu0 0.0
    %727 = vmatprep.subr.mxu0 0.0
    %728 = vmatpush1.msra.mxu0 0.0
    %729 = vmatprep.subr.mxu0 0.0
    %730 = vmatpush1.msra.mxu0 0.0
    %731 = vmatprep.subr.mxu0 0.0
    %732 = vmatpush1.msra.mxu0 0.0
    %733 = vmatprep.subr.mxu0 0.0
    %734 = vmatpush1.msra.mxu0 0.0
    %735 = vmatprep.subr.mxu0 0.0
    %736 = vmatpush1.msra.mxu0 0.0
    %737 = vmatprep.subr.mxu0 0.0
    %738 = vmatpush1.msra.mxu0 0.0
    %739 = vmatprep.subr.mxu0 0.0
    %740 = vmatpush1.msra.mxu0 0.0
    %741 = vmatprep.subr.mxu0 0.0
    %742 = vmatpush1.msra.mxu0 0.0
    %743 = vmatprep.subr.mxu0 0.0
    %744 = vmatpush1.msra.mxu0 0.0
    %745 = vmatprep.subr.mxu0 0.0
    %746 = vmatpush1.msra.mxu0 0.0
    %747 = vmatprep.subr.mxu0 0.0
    %748 = vmatpush1.msra.mxu0 0.0
    %749 = vmatprep.subr.mxu0 0.0
    %750 = vmatpush1.msra.mxu0 0.0
    %751 = vmatprep.subr.mxu0 0.0
    %752 = vmatpush1.msra.mxu0 0.0
    %753 = vmatprep.subr.mxu0 0.0
    %754 = vmatpush1.msra.mxu0 0.0
    %755 = vmatprep.mubr.f32.mxu0 0.0
    %756 = vmatmul.mubr.f32.gmra.mrb[0].mxu0 %v689
    %v757 = vpop.f32.mrb[0].mxu0
    %v758 = vadd.f32 %v687, %v757
    %v759 = vpop.f32.mrb[0].mxu0
    %760 = vdwg.mxu0
    %v761 = vtanh.pop %v758
    %s762 = scalar_lea.vmem [#allocation4], 256
    %v763 = vld [vmem:[%s762] sm:$0xff]
    %v764 = vld [vmem:[%s762 + $0x8] sm:$0xff]
    %v765 = vld [vmem:[%s762 + $0x10] sm:$0xff]
    %v766 = vld [vmem:[%s762 + $0x18] sm:$0xff]
    %v767 = vld [vmem:[#allocation6 + $0x8] sm:$0x1]
    %v768 = vlaneseq
    %v769 = vshrl.u32 %v768, 7
    %v770 = vsub.s32 0, %v769
    %v771 = vrot.slane %v767, %v770
    %v773 = vsel %vm63, %v761, 0
    %775 = vmatprep.subr.mxu0 0.0
    %776 = vmatpush1.msra.mxu0 %v763
    %777 = vmatprep.subr.mxu0 0.0
    %778 = vmatpush1.msra.mxu0 %v764
    %779 = vmatprep.subr.mxu0 0.0
    %780 = vmatpush1.msra.mxu0 %v765
    %781 = vmatprep.subr.mxu0 0.0
    %782 = vmatpush1.msra.mxu0 %v766
    %783 = vmatprep.subr.mxu0 0.0
    %784 = vmatpush1.msra.mxu0 0.0
    %785 = vmatprep.subr.mxu0 0.0
    %786 = vmatpush1.msra.mxu0 0.0
    %787 = vmatprep.subr.mxu0 0.0
    %788 = vmatpush1.msra.mxu0 0.0
    %789 = vmatprep.subr.mxu0 0.0
    %790 = vmatpush1.msra.mxu0 0.0
    %791 = vmatprep.subr.mxu0 0.0
    %792 = vmatpush1.msra.mxu0 0.0
    %793 = vmatprep.subr.mxu0 0.0
    %794 = vmatpush1.msra.mxu0 0.0
    %795 = vmatprep.subr.mxu0 0.0
    %796 = vmatpush1.msra.mxu0 0.0
    %797 = vmatprep.subr.mxu0 0.0
    %798 = vmatpush1.msra.mxu0 0.0
    %799 = vmatprep.subr.mxu0 0.0
    %800 = vmatpush1.msra.mxu0 0.0
    %801 = vmatprep.subr.mxu0 0.0
    %802 = vmatpush1.msra.mxu0 0.0
    %803 = vmatprep.subr.mxu0 0.0
    %804 = vmatpush1.msra.mxu0 0.0
    %805 = vmatprep.subr.mxu0 0.0
    %806 = vmatpush1.msra.mxu0 0.0
    %807 = vmatprep.subr.mxu0 0.0
    %808 = vmatpush1.msra.mxu0 0.0
    %809 = vmatprep.subr.mxu0 0.0
    %810 = vmatpush1.msra.mxu0 0.0
    %811 = vmatprep.subr.mxu0 0.0
    %812 = vmatpush1.msra.mxu0 0.0
    %813 = vmatprep.subr.mxu0 0.0
    %814 = vmatpush1.msra.mxu0 0.0
    %815 = vmatprep.subr.mxu0 0.0
    %816 = vmatpush1.msra.mxu0 0.0
    %817 = vmatprep.subr.mxu0 0.0
    %818 = vmatpush1.msra.mxu0 0.0
    %819 = vmatprep.subr.mxu0 0.0
    %820 = vmatpush1.msra.mxu0 0.0
    %821 = vmatprep.subr.mxu0 0.0
    %822 = vmatpush1.msra.mxu0 0.0
    %823 = vmatprep.subr.mxu0 0.0
    %824 = vmatpush1.msra.mxu0 0.0
    %825 = vmatprep.subr.mxu0 0.0
    %826 = vmatpush1.msra.mxu0 0.0
    %827 = vmatprep.subr.mxu0 0.0
    %828 = vmatpush1.msra.mxu0 0.0
    %829 = vmatprep.subr.mxu0 0.0
    %830 = vmatpush1.msra.mxu0 0.0
    %831 = vmatprep.subr.mxu0 0.0
    %832 = vmatpush1.msra.mxu0 0.0
    %833 = vmatprep.subr.mxu0 0.0
    %834 = vmatpush1.msra.mxu0 0.0
    %835 = vmatprep.subr.mxu0 0.0
    %836 = vmatpush1.msra.mxu0 0.0
    %837 = vmatprep.subr.mxu0 0.0
    %838 = vmatpush1.msra.mxu0 0.0
    %839 = vmatprep.mubr.f32.mxu0 0.0
    %840 = vmatmul.mubr.f32.gmra.mrb[0].mxu0 %v773
    %v841 = vpop.f32.mrb[0].mxu0
    %v842 = vadd.f32 %v771, %v841
    %v843 = vpop.f32.mrb[0].mxu0
    %844 = vdwg.mxu0
    %vm845 = vcmp.lt.s32.totalorder %v587, 4
    %v846 = vsel %vm845, %v842, -1e+30
    %847 = vmax.xlane.f32.xlu0 %v846
    %v848 = vpop.xlane.xlu0 %847
    %v849 = vsub.f32 %v846, %v848
    %v850 = vmul.f32 %v849, 1.442695
    %v851 = vpow.pop %v850
    %852 = vadd.xlane.f32.xlu0 %v851
    %v853 = vpop.xlane.xlu0 %852
    %v854 = vrcp.pop %v853
    %v855 = vmul.f32 %v851, %v854
    %856 = vst [vmem:[%s3] sm:$0xff] %v553
    %s857 = scalar_lea.vmem %s3, 8
    %858 = vst [vmem:[%s857] sm:$0xff] %v593
    %s859 = scalar_lea.vmem %s3, 16
    %860 = vst [vmem:[%s859] sm:$0xff] %v855
    // Predicated region
    $region26: #{dagmm_forward.1} parent=1 // pred_check
      _
    $region27: #{dagmm_forward.1} parent=1 // pred_check_branch
      %862 = sbr.rel (0) target = $region29
    $region28: #{dagmm_forward.1} parent=1 // pred_region
      _
    $region29: #{dagmm_forward.1} parent=1 // pred_fallthru
      _
    // Predicated region
    $region30: #{dagmm_forward.1} parent=1 // pred_check
      _
    $region31: #{dagmm_forward.1} parent=1 // pred_check_branch
      %864 = sbr.rel (0) target = $region33
    $region32: #{dagmm_forward.1} parent=1 // pred_region
      _
    $region33: #{dagmm_forward.1} parent=1 // pred_fallthru
      _
    %865 = vsyncpa [#allocation3], 1
    %866 = vsyncpa [#allocation5], 1

</llo_original>
